<compile_context>
chip_gen: v5e
topology: v5e:2x2
jax: 0.10.0
libtpu: 0.0.40
codegen_flags: <defaults>
</compile_context>

<pallas_src>
import functools

import jax
import jax.numpy as jnp
from jax import lax
from jax.experimental import pallas as pl
from jax.experimental.pallas import tpu as pltpu


def _round_up(v, m):
    return ((v + m - 1) // m) * m


# ---------------------------------------------------------------------------
# Pallas kernel: fused zero-pad + im2col + single K-deep matmul + bias + act
# ---------------------------------------------------------------------------
def _conv2d_block_kernel(x_ref, w_ref, b_ref, o_ref, strip_ref, *,
                         n_batch, h, w, wp, padding, simg, taps, activation):
    """
    x_ref:     (N, Cin, H*W)    f32   unpadded input, spatial flattened
    w_ref:     (Cout, K)        bf16  K = KH*KW*Cin (tap-major, channel-minor)
    b_ref:     (Cout, 1)        f32   bias
    o_ref:     (N, Cout, SIMG)  f32   per-image 128-aligned dense-output block
    strip_ref: (Cin, SLEN)      f32   scratch: zero-padded flat strips of all
                                      images laid back-to-back, SIMG apart
    """
    ltot = n_batch * simg

    # ---- fused zero-pad: build padded flat strips in VMEM ----------------
    strip_ref[...] = jnp.zeros(strip_ref.shape, strip_ref.dtype)
    x = x_ref[...]                                        # (N, Cin, H*W) f32
    for n in range(n_batch):                              # static unroll
        for r in range(h):
            dst = n * simg + (r + padding) * wp + padding
            strip_ref[:, dst:dst + w] = x[n, :, r * w:(r + 1) * w]

    # ---- im2col: one shifted slice per tap, stacked along sublanes -------
    # A single length-(N*SIMG) slice per tap covers BOTH images at once;
    # garbage only lands in lanes of the per-image gap / wrap columns, which
    # the wrapper crops.
    strip = strip_ref[...]                                # (Cin, SLEN) f32
    col = jnp.concatenate([strip[:, off:off + ltot] for off in taps], axis=0)
    col = col.astype(w_ref.dtype)                         # (K, N*SIMG) bf16

    # ---- single K-deep matmul on the MXU, f32 accumulation ---------------
    acc = jnp.dot(w_ref[...], col,
                  preferred_element_type=jnp.float32)     # (Cout, N*SIMG) f32
    acc = acc + b_ref[...]                                # (Cout, 1) broadcast

    # TODO(synk): norm variants ('bn'/'in'/'ln'/'adain') not implemented; the
    # module default is norm='none'.
    if activation == "relu":
        acc = jnp.maximum(acc, 0.0)
    elif activation == "lrelu":
        acc = jnp.where(acc >= 0.0, acc, 0.2 * acc)
    elif activation == "tanh":
        acc = jnp.tanh(acc)
    elif activation == "sigmoid":
        acc = jax.nn.sigmoid(acc)
    elif activation == "none":
        pass
    else:
        # TODO(synk): 'prelu' (learned slope) and 'selu' not implemented.
        raise ValueError(f"unsupported activation {activation}")

    # ---- lane-aligned, unmasked per-image stores (SIMG % 128 == 0) -------
    for n in range(n_batch):
        o_ref[n] = acc[:, n * simg:(n + 1) * simg]


# ---------------------------------------------------------------------------
# Conv2dBlock forward (zero pad + conv + bias + activation); NCHW in / out
# ---------------------------------------------------------------------------
def conv2d_block_forward(x, weight, bias, *, stride=1, padding=0, dilation=1,
                         activation="relu"):
    """
    x:      (N, Cin, H, W)       float32  (NCHW, matching PyTorch)
    weight: (Cout, Cin, KH, KW)  float32  (PyTorch conv weight layout)
    bias:   (Cout,)              float32
    """
    N, Cin, H, W = x.shape
    Cout, Cin_w, KH, KW = weight.shape
    assert Cin == Cin_w

    Hp, Wp = H + 2 * padding, W + 2 * padding
    Ho_d = Hp - dilation * (KH - 1)          # dense (stride-1) output extents
    Wo_d = Wp - dilation * (KW - 1)
    assert Ho_d >= 1 and Wo_d >= 1
    Ho = (Ho_d - 1) // stride + 1
    Wo = (Wo_d - 1) // stride + 1

    # Each tap (kh, kw) is a pure lane-offset slice of the flattened padded
    # strip; dense output rows contain Wo_d valid columns + wrap columns.
    L = Ho_d * Wp
    taps = tuple(kh * dilation * Wp + kw * dilation
                 for kh in range(KH) for kw in range(KW))
    K = KH * KW * Cin
    SIMG = _round_up(Hp * Wp, 128)           # per-image lane block (>= L)
    SLEN = _round_up(N * SIMG + max(taps), 128)

    # Free (bitcast) reshape -- no padded/cast copy of x is ever made in HBM.
    x_flat = x.reshape(N, Cin, H * W)
    # (Cout, K) weight matrix matching im2col row order (kh, kw, ci).
    w_mat = weight.transpose(0, 2, 3, 1).reshape(Cout, K).astype(jnp.bfloat16)
    bias2d = bias.reshape(Cout, 1).astype(jnp.float32)

    kernel = functools.partial(
        _conv2d_block_kernel, n_batch=N, h=H, w=W, wp=Wp, padding=padding,
        simg=SIMG, taps=taps, activation=activation)

    out_flat = pl.pallas_call(
        kernel,
        out_shape=jax.ShapeDtypeStruct((N, Cout, SIMG), jnp.float32),
        grid=(1,),                            # single step: whole batch at once
        in_specs=[
            pl.BlockSpec((N, Cin, H * W), lambda i: (0, 0, 0)),
            pl.BlockSpec((Cout, K), lambda i: (0, 0)),
            pl.BlockSpec((Cout, 1), lambda i: (0, 0)),
        ],
        out_specs=pl.BlockSpec((N, Cout, SIMG), lambda i: (0, 0, 0)),
        scratch_shapes=[pltpu.VMEM((Cin, SLEN), jnp.float32)],
        compiler_params=pltpu.CompilerParams(
            dimension_semantics=("arbitrary",),
            vmem_limit_bytes=32 * 1024 * 1024,
        ),
    )(x_flat, w_mat, bias2d)

    # Crop wrap columns / per-image lane padding straight into NCHW.
    # TODO(synk): for stride > 1 the kernel computes the dense output and the
    # wrapper subsamples; restrict matmul columns if reused with stride > 1.
    out = out_flat[:, :, :L].reshape(N, Cout, Ho_d, Wp)
    out = out[:, :, ::stride, ::stride][:, :, :Ho, :Wo]
    return out


# ---------------------------------------------------------------------------
# Main
# ---------------------------------------------------------------------------
if __name__ == "__main__":
    # Module config: Conv2dBlock(input_dim=4, output_dim=8, kernel_size=3,
    #                            stride=1, padding=1)  (defaults otherwise)
    N, Cin, H, W = 2, 4, 16, 16
    Cout, KH, KW = 8, 3, 3
    stride, padding, dilation = 1, 1, 1

    key = jax.random.PRNGKey(0)
    kx, kw_, kb = jax.random.split(key, 3)
    x = jax.random.normal(kx, (N, Cin, H, W), dtype=jnp.float32)
    # Deterministic synthetic parameters (shapes from nn.Conv2d(4, 8, 3)).
    weight = jax.random.normal(kw_, (Cout, Cin, KH, KW), dtype=jnp.float32) * 0.1
    bias = jax.random.normal(kb, (Cout,), dtype=jnp.float32) * 0.1

    fwd = jax.jit(functools.partial(conv2d_block_forward, stride=stride,
                                    padding=padding, dilation=dilation,
                                    activation="relu"))
    out = jax.block_until_ready(fwd(x, weight, bias))

    # Reference: exact f32 conv with the same semantics as torch.nn.Conv2d.
    ref = lax.conv_general_dilated(
        x, weight,
        window_strides=(stride, stride),
        padding=[(padding, padding), (padding, padding)],
        rhs_dilation=(dilation, dilation),
        dimension_numbers=("NCHW", "OIHW", "NCHW"),
    ) + bias.reshape(1, Cout, 1, 1)
    ref = jnp.maximum(ref, 0.0)

    assert out.shape == (N, Cout, H, W), out.shape
    # Kernel uses bf16 matmul operands (f32 accumulation), so compare against
    # the exact-f32 reference with a bf16-level tolerance.
    max_err = float(jnp.max(jnp.abs(out - ref)))
    assert jnp.allclose(out, ref, atol=2e-2, rtol=2e-2), max_err

    print("KERNEL_OK")
</pallas_src>

<mosaic_0001>
module attributes {stable_mosaic.version = 11 : i64} {
  func.func @_conv2d_block_kernel(%arg0: i32, %arg1: memref<2x4x256xf32, #tpu.memory_space<vmem>>, %arg2: memref<8x36xbf16, #tpu.memory_space<vmem>>, %arg3: memref<8x1xf32, #tpu.memory_space<vmem>>, %arg4: memref<2x8x384xf32, #tpu.memory_space<vmem>>, %arg5: memref<4x896xf32, #tpu.memory_space<vmem>>) attributes {dimension_semantics = [#tpu.dimension_semantics<arbitrary>], iteration_bounds = array<i64: 1>, scalar_prefetch = 0 : i64, scratch_operands = 1 : i64, tpu.core_type = #tpu.core_type<tc>, window_params = [{pipeline_mode = #tpu.pipeline_mode<synchronous>, transform_indices = @transform_0, window_bounds = array<i64: 2, 4, 256>}, {pipeline_mode = #tpu.pipeline_mode<synchronous>, transform_indices = @transform_1, window_bounds = array<i64: 8, 36>}, {pipeline_mode = #tpu.pipeline_mode<synchronous>, transform_indices = @transform_2, window_bounds = array<i64: 8, 1>}, {pipeline_mode = #tpu.pipeline_mode<synchronous>, transform_indices = @transform_3, window_bounds = array<i64: 2, 8, 384>}]} {
    %cst = arith.constant 0.000000e+00 : f32
    %0 = vector.broadcast %cst : f32 to vector<4x896xf32>
    %c0 = arith.constant 0 : index
    %c0_0 = arith.constant 0 : index
    %1 = vector.load %arg5[%c0, %c0_0] : memref<4x896xf32, #tpu.memory_space<vmem>>, vector<4x896xf32>
    tpu.vector_store %arg5[%c0, %c0_0], %0 {strides = array<i32>} : memref<4x896xf32, #tpu.memory_space<vmem>>, vector<4x896xf32>,
    %c0_1 = arith.constant 0 : index
    %c0_2 = arith.constant 0 : index
    %c0_3 = arith.constant 0 : index
    %2 = vector.load %arg1[%c0_1, %c0_2, %c0_3] : memref<2x4x256xf32, #tpu.memory_space<vmem>>, vector<2x4x256xf32>
    %3 = vector.extract_strided_slice %2 {offsets = [0, 0, 0], sizes = [1, 4, 16], strides = [1, 1, 1]} : vector<2x4x256xf32> to vector<1x4x16xf32>
    %4 = vector.shape_cast %3 : vector<1x4x16xf32> to vector<4x16xf32>
    %c0_4 = arith.constant 0 : index
    %c19 = arith.constant 19 : index
    %5 = vector.load %arg5[%c0_4, %c19] : memref<4x896xf32, #tpu.memory_space<vmem>>, vector<4x16xf32>
    tpu.vector_store %arg5[%c0_4, %c19], %4 {strides = array<i32>} : memref<4x896xf32, #tpu.memory_space<vmem>>, vector<4x16xf32>,
    %6 = vector.extract_strided_slice %2 {offsets = [0, 0, 16], sizes = [1, 4, 16], strides = [1, 1, 1]} : vector<2x4x256xf32> to vector<1x4x16xf32>
    %7 = vector.shape_cast %6 : vector<1x4x16xf32> to vector<4x16xf32>
    %c0_5 = arith.constant 0 : index
    %c37 = arith.constant 37 : index
    %8 = vector.load %arg5[%c0_5, %c37] : memref<4x896xf32, #tpu.memory_space<vmem>>, vector<4x16xf32>
    tpu.vector_store %arg5[%c0_5, %c37], %7 {strides = array<i32>} : memref<4x896xf32, #tpu.memory_space<vmem>>, vector<4x16xf32>,
    %9 = vector.extract_strided_slice %2 {offsets = [0, 0, 32], sizes = [1, 4, 16], strides = [1, 1, 1]} : vector<2x4x256xf32> to vector<1x4x16xf32>
    %10 = vector.shape_cast %9 : vector<1x4x16xf32> to vector<4x16xf32>
    %c0_6 = arith.constant 0 : index
    %c55 = arith.constant 55 : index
    %11 = vector.load %arg5[%c0_6, %c55] : memref<4x896xf32, #tpu.memory_space<vmem>>, vector<4x16xf32>
    tpu.vector_store %arg5[%c0_6, %c55], %10 {strides = array<i32>} : memref<4x896xf32, #tpu.memory_space<vmem>>, vector<4x16xf32>,
    %12 = vector.extract_strided_slice %2 {offsets = [0, 0, 48], sizes = [1, 4, 16], strides = [1, 1, 1]} : vector<2x4x256xf32> to vector<1x4x16xf32>
    %13 = vector.shape_cast %12 : vector<1x4x16xf32> to vector<4x16xf32>
    %c0_7 = arith.constant 0 : index
    %c73 = arith.constant 73 : index
    %14 = vector.load %arg5[%c0_7, %c73] : memref<4x896xf32, #tpu.memory_space<vmem>>, vector<4x16xf32>
    tpu.vector_store %arg5[%c0_7, %c73], %13 {strides = array<i32>} : memref<4x896xf32, #tpu.memory_space<vmem>>, vector<4x16xf32>,
    %15 = vector.extract_strided_slice %2 {offsets = [0, 0, 64], sizes = [1, 4, 16], strides = [1, 1, 1]} : vector<2x4x256xf32> to vector<1x4x16xf32>
    %16 = vector.shape_cast %15 : vector<1x4x16xf32> to vector<4x16xf32>
    %c0_8 = arith.constant 0 : index
    %c91 = arith.constant 91 : index
    %17 = vector.load %arg5[%c0_8, %c91] : memref<4x896xf32, #tpu.memory_space<vmem>>, vector<4x16xf32>
    tpu.vector_store %arg5[%c0_8, %c91], %16 {strides = array<i32>} : memref<4x896xf32, #tpu.memory_space<vmem>>, vector<4x16xf32>,
    %18 = vector.extract_strided_slice %2 {offsets = [0, 0, 80], sizes = [1, 4, 16], strides = [1, 1, 1]} : vector<2x4x256xf32> to vector<1x4x16xf32>
    %19 = vector.shape_cast %18 : vector<1x4x16xf32> to vector<4x16xf32>
    %c0_9 = arith.constant 0 : index
    %c109 = arith.constant 109 : index
    %20 = vector.load %arg5[%c0_9, %c109] : memref<4x896xf32, #tpu.memory_space<vmem>>, vector<4x16xf32>
    tpu.vector_store %arg5[%c0_9, %c109], %19 {strides = array<i32>} : memref<4x896xf32, #tpu.memory_space<vmem>>, vector<4x16xf32>,
    %21 = vector.extract_strided_slice %2 {offsets = [0, 0, 96], sizes = [1, 4, 16], strides = [1, 1, 1]} : vector<2x4x256xf32> to vector<1x4x16xf32>
    %22 = vector.shape_cast %21 : vector<1x4x16xf32> to vector<4x16xf32>
    %c0_10 = arith.constant 0 : index
    %c127 = arith.constant 127 : index
    %23 = vector.load %arg5[%c0_10, %c127] : memref<4x896xf32, #tpu.memory_space<vmem>>, vector<4x16xf32>
    tpu.vector_store %arg5[%c0_10, %c127], %22 {strides = array<i32>} : memref<4x896xf32, #tpu.memory_space<vmem>>, vector<4x16xf32>,
    %24 = vector.extract_strided_slice %2 {offsets = [0, 0, 112], sizes = [1, 4, 16], strides = [1, 1, 1]} : vector<2x4x256xf32> to vector<1x4x16xf32>
    %25 = vector.shape_cast %24 : vector<1x4x16xf32> to vector<4x16xf32>
    %c0_11 = arith.constant 0 : index
    %c145 = arith.constant 145 : index
    %26 = vector.load %arg5[%c0_11, %c145] : memref<4x896xf32, #tpu.memory_space<vmem>>, vector<4x16xf32>
    tpu.vector_store %arg5[%c0_11, %c145], %25 {strides = array<i32>} : memref<4x896xf32, #tpu.memory_space<vmem>>, vector<4x16xf32>,
    %27 = vector.extract_strided_slice %2 {offsets = [0, 0, 128], sizes = [1, 4, 16], strides = [1, 1, 1]} : vector<2x4x256xf32> to vector<1x4x16xf32>
    %28 = vector.shape_cast %27 : vector<1x4x16xf32> to vector<4x16xf32>
    %c0_12 = arith.constant 0 : index
    %c163 = arith.constant 163 : index
    %29 = vector.load %arg5[%c0_12, %c163] : memref<4x896xf32, #tpu.memory_space<vmem>>, vector<4x16xf32>
    tpu.vector_store %arg5[%c0_12, %c163], %28 {strides = array<i32>} : memref<4x896xf32, #tpu.memory_space<vmem>>, vector<4x16xf32>,
    %30 = vector.extract_strided_slice %2 {offsets = [0, 0, 144], sizes = [1, 4, 16], strides = [1, 1, 1]} : vector<2x4x256xf32> to vector<1x4x16xf32>
    %31 = vector.shape_cast %30 : vector<1x4x16xf32> to vector<4x16xf32>
    %c0_13 = arith.constant 0 : index
    %c181 = arith.constant 181 : index
    %32 = vector.load %arg5[%c0_13, %c181] : memref<4x896xf32, #tpu.memory_space<vmem>>, vector<4x16xf32>
    tpu.vector_store %arg5[%c0_13, %c181], %31 {strides = array<i32>} : memref<4x896xf32, #tpu.memory_space<vmem>>, vector<4x16xf32>,
    %33 = vector.extract_strided_slice %2 {offsets = [0, 0, 160], sizes = [1, 4, 16], strides = [1, 1, 1]} : vector<2x4x256xf32> to vector<1x4x16xf32>
    %34 = vector.shape_cast %33 : vector<1x4x16xf32> to vector<4x16xf32>
    %c0_14 = arith.constant 0 : index
    %c199 = arith.constant 199 : index
    %35 = vector.load %arg5[%c0_14, %c199] : memref<4x896xf32, #tpu.memory_space<vmem>>, vector<4x16xf32>
    tpu.vector_store %arg5[%c0_14, %c199], %34 {strides = array<i32>} : memref<4x896xf32, #tpu.memory_space<vmem>>, vector<4x16xf32>,
    %36 = vector.extract_strided_slice %2 {offsets = [0, 0, 176], sizes = [1, 4, 16], strides = [1, 1, 1]} : vector<2x4x256xf32> to vector<1x4x16xf32>
    %37 = vector.shape_cast %36 : vector<1x4x16xf32> to vector<4x16xf32>
    %c0_15 = arith.constant 0 : index
    %c217 = arith.constant 217 : index
    %38 = vector.load %arg5[%c0_15, %c217] : memref<4x896xf32, #tpu.memory_space<vmem>>, vector<4x16xf32>
    tpu.vector_store %arg5[%c0_15, %c217], %37 {strides = array<i32>} : memref<4x896xf32, #tpu.memory_space<vmem>>, vector<4x16xf32>,
    %39 = vector.extract_strided_slice %2 {offsets = [0, 0, 192], sizes = [1, 4, 16], strides = [1, 1, 1]} : vector<2x4x256xf32> to vector<1x4x16xf32>
    %40 = vector.shape_cast %39 : vector<1x4x16xf32> to vector<4x16xf32>
    %c0_16 = arith.constant 0 : index
    %c235 = arith.constant 235 : index
    %41 = vector.load %arg5[%c0_16, %c235] : memref<4x896xf32, #tpu.memory_space<vmem>>, vector<4x16xf32>
    tpu.vector_store %arg5[%c0_16, %c235], %40 {strides = array<i32>} : memref<4x896xf32, #tpu.memory_space<vmem>>, vector<4x16xf32>,
    %42 = vector.extract_strided_slice %2 {offsets = [0, 0, 208], sizes = [1, 4, 16], strides = [1, 1, 1]} : vector<2x4x256xf32> to vector<1x4x16xf32>
    %43 = vector.shape_cast %42 : vector<1x4x16xf32> to vector<4x16xf32>
    %c0_17 = arith.constant 0 : index
    %c253 = arith.constant 253 : index
    %44 = vector.load %arg5[%c0_17, %c253] : memref<4x896xf32, #tpu.memory_space<vmem>>, vector<4x16xf32>
    tpu.vector_store %arg5[%c0_17, %c253], %43 {strides = array<i32>} : memref<4x896xf32, #tpu.memory_space<vmem>>, vector<4x16xf32>,
    %45 = vector.extract_strided_slice %2 {offsets = [0, 0, 224], sizes = [1, 4, 16], strides = [1, 1, 1]} : vector<2x4x256xf32> to vector<1x4x16xf32>
    %46 = vector.shape_cast %45 : vector<1x4x16xf32> to vector<4x16xf32>
    %c0_18 = arith.constant 0 : index
    %c271 = arith.constant 271 : index
    %47 = vector.load %arg5[%c0_18, %c271] : memref<4x896xf32, #tpu.memory_space<vmem>>, vector<4x16xf32>
    tpu.vector_store %arg5[%c0_18, %c271], %46 {strides = array<i32>} : memref<4x896xf32, #tpu.memory_space<vmem>>, vector<4x16xf32>,
    %48 = vector.extract_strided_slice %2 {offsets = [0, 0, 240], sizes = [1, 4, 16], strides = [1, 1, 1]} : vector<2x4x256xf32> to vector<1x4x16xf32>
    %49 = vector.shape_cast %48 : vector<1x4x16xf32> to vector<4x16xf32>
    %c0_19 = arith.constant 0 : index
    %c289 = arith.constant 289 : index
    %50 = vector.load %arg5[%c0_19, %c289] : memref<4x896xf32, #tpu.memory_space<vmem>>, vector<4x16xf32>
    tpu.vector_store %arg5[%c0_19, %c289], %49 {strides = array<i32>} : memref<4x896xf32, #tpu.memory_space<vmem>>, vector<4x16xf32>,
    %51 = vector.extract_strided_slice %2 {offsets = [1, 0, 0], sizes = [1, 4, 16], strides = [1, 1, 1]} : vector<2x4x256xf32> to vector<1x4x16xf32>
    %52 = vector.shape_cast %51 : vector<1x4x16xf32> to vector<4x16xf32>
    %c0_20 = arith.constant 0 : index
    %c403 = arith.constant 403 : index
    %53 = vector.load %arg5[%c0_20, %c403] : memref<4x896xf32, #tpu.memory_space<vmem>>, vector<4x16xf32>
    tpu.vector_store %arg5[%c0_20, %c403], %52 {strides = array<i32>} : memref<4x896xf32, #tpu.memory_space<vmem>>, vector<4x16xf32>,
    %54 = vector.extract_strided_slice %2 {offsets = [1, 0, 16], sizes = [1, 4, 16], strides = [1, 1, 1]} : vector<2x4x256xf32> to vector<1x4x16xf32>
    %55 = vector.shape_cast %54 : vector<1x4x16xf32> to vector<4x16xf32>
    %c0_21 = arith.constant 0 : index
    %c421 = arith.constant 421 : index
    %56 = vector.load %arg5[%c0_21, %c421] : memref<4x896xf32, #tpu.memory_space<vmem>>, vector<4x16xf32>
    tpu.vector_store %arg5[%c0_21, %c421], %55 {strides = array<i32>} : memref<4x896xf32, #tpu.memory_space<vmem>>, vector<4x16xf32>,
    %57 = vector.extract_strided_slice %2 {offsets = [1, 0, 32], sizes = [1, 4, 16], strides = [1, 1, 1]} : vector<2x4x256xf32> to vector<1x4x16xf32>
    %58 = vector.shape_cast %57 : vector<1x4x16xf32> to vector<4x16xf32>
    %c0_22 = arith.constant 0 : index
    %c439 = arith.constant 439 : index
    %59 = vector.load %arg5[%c0_22, %c439] : memref<4x896xf32, #tpu.memory_space<vmem>>, vector<4x16xf32>
    tpu.vector_store %arg5[%c0_22, %c439], %58 {strides = array<i32>} : memref<4x896xf32, #tpu.memory_space<vmem>>, vector<4x16xf32>,
    %60 = vector.extract_strided_slice %2 {offsets = [1, 0, 48], sizes = [1, 4, 16], strides = [1, 1, 1]} : vector<2x4x256xf32> to vector<1x4x16xf32>
    %61 = vector.shape_cast %60 : vector<1x4x16xf32> to vector<4x16xf32>
    %c0_23 = arith.constant 0 : index
    %c457 = arith.constant 457 : index
    %62 = vector.load %arg5[%c0_23, %c457] : memref<4x896xf32, #tpu.memory_space<vmem>>, vector<4x16xf32>
    tpu.vector_store %arg5[%c0_23, %c457], %61 {strides = array<i32>} : memref<4x896xf32, #tpu.memory_space<vmem>>, vector<4x16xf32>,
    %63 = vector.extract_strided_slice %2 {offsets = [1, 0, 64], sizes = [1, 4, 16], strides = [1, 1, 1]} : vector<2x4x256xf32> to vector<1x4x16xf32>
    %64 = vector.shape_cast %63 : vector<1x4x16xf32> to vector<4x16xf32>
    %c0_24 = arith.constant 0 : index
    %c475 = arith.constant 475 : index
    %65 = vector.load %arg5[%c0_24, %c475] : memref<4x896xf32, #tpu.memory_space<vmem>>, vector<4x16xf32>
    tpu.vector_store %arg5[%c0_24, %c475], %64 {strides = array<i32>} : memref<4x896xf32, #tpu.memory_space<vmem>>, vector<4x16xf32>,
    %66 = vector.extract_strided_slice %2 {offsets = [1, 0, 80], sizes = [1, 4, 16], strides = [1, 1, 1]} : vector<2x4x256xf32> to vector<1x4x16xf32>
    %67 = vector.shape_cast %66 : vector<1x4x16xf32> to vector<4x16xf32>
    %c0_25 = arith.constant 0 : index
    %c493 = arith.constant 493 : index
    %68 = vector.load %arg5[%c0_25, %c493] : memref<4x896xf32, #tpu.memory_space<vmem>>, vector<4x16xf32>
    tpu.vector_store %arg5[%c0_25, %c493], %67 {strides = array<i32>} : memref<4x896xf32, #tpu.memory_space<vmem>>, vector<4x16xf32>,
    %69 = vector.extract_strided_slice %2 {offsets = [1, 0, 96], sizes = [1, 4, 16], strides = [1, 1, 1]} : vector<2x4x256xf32> to vector<1x4x16xf32>
    %70 = vector.shape_cast %69 : vector<1x4x16xf32> to vector<4x16xf32>
    %c0_26 = arith.constant 0 : index
    %c511 = arith.constant 511 : index
    %71 = vector.load %arg5[%c0_26, %c511] : memref<4x896xf32, #tpu.memory_space<vmem>>, vector<4x16xf32>
    tpu.vector_store %arg5[%c0_26, %c511], %70 {strides = array<i32>} : memref<4x896xf32, #tpu.memory_space<vmem>>, vector<4x16xf32>,
    %72 = vector.extract_strided_slice %2 {offsets = [1, 0, 112], sizes = [1, 4, 16], strides = [1, 1, 1]} : vector<2x4x256xf32> to vector<1x4x16xf32>
    %73 = vector.shape_cast %72 : vector<1x4x16xf32> to vector<4x16xf32>
    %c0_27 = arith.constant 0 : index
    %c529 = arith.constant 529 : index
    %74 = vector.load %arg5[%c0_27, %c529] : memref<4x896xf32, #tpu.memory_space<vmem>>, vector<4x16xf32>
    tpu.vector_store %arg5[%c0_27, %c529], %73 {strides = array<i32>} : memref<4x896xf32, #tpu.memory_space<vmem>>, vector<4x16xf32>,
    %75 = vector.extract_strided_slice %2 {offsets = [1, 0, 128], sizes = [1, 4, 16], strides = [1, 1, 1]} : vector<2x4x256xf32> to vector<1x4x16xf32>
    %76 = vector.shape_cast %75 : vector<1x4x16xf32> to vector<4x16xf32>
    %c0_28 = arith.constant 0 : index
    %c547 = arith.constant 547 : index
    %77 = vector.load %arg5[%c0_28, %c547] : memref<4x896xf32, #tpu.memory_space<vmem>>, vector<4x16xf32>
    tpu.vector_store %arg5[%c0_28, %c547], %76 {strides = array<i32>} : memref<4x896xf32, #tpu.memory_space<vmem>>, vector<4x16xf32>,
    %78 = vector.extract_strided_slice %2 {offsets = [1, 0, 144], sizes = [1, 4, 16], strides = [1, 1, 1]} : vector<2x4x256xf32> to vector<1x4x16xf32>
    %79 = vector.shape_cast %78 : vector<1x4x16xf32> to vector<4x16xf32>
    %c0_29 = arith.constant 0 : index
    %c565 = arith.constant 565 : index
    %80 = vector.load %arg5[%c0_29, %c565] : memref<4x896xf32, #tpu.memory_space<vmem>>, vector<4x16xf32>
    tpu.vector_store %arg5[%c0_29, %c565], %79 {strides = array<i32>} : memref<4x896xf32, #tpu.memory_space<vmem>>, vector<4x16xf32>,
    %81 = vector.extract_strided_slice %2 {offsets = [1, 0, 160], sizes = [1, 4, 16], strides = [1, 1, 1]} : vector<2x4x256xf32> to vector<1x4x16xf32>
    %82 = vector.shape_cast %81 : vector<1x4x16xf32> to vector<4x16xf32>
    %c0_30 = arith.constant 0 : index
    %c583 = arith.constant 583 : index
    %83 = vector.load %arg5[%c0_30, %c583] : memref<4x896xf32, #tpu.memory_space<vmem>>, vector<4x16xf32>
    tpu.vector_store %arg5[%c0_30, %c583], %82 {strides = array<i32>} : memref<4x896xf32, #tpu.memory_space<vmem>>, vector<4x16xf32>,
    %84 = vector.extract_strided_slice %2 {offsets = [1, 0, 176], sizes = [1, 4, 16], strides = [1, 1, 1]} : vector<2x4x256xf32> to vector<1x4x16xf32>
    %85 = vector.shape_cast %84 : vector<1x4x16xf32> to vector<4x16xf32>
    %c0_31 = arith.constant 0 : index
    %c601 = arith.constant 601 : index
    %86 = vector.load %arg5[%c0_31, %c601] : memref<4x896xf32, #tpu.memory_space<vmem>>, vector<4x16xf32>
    tpu.vector_store %arg5[%c0_31, %c601], %85 {strides = array<i32>} : memref<4x896xf32, #tpu.memory_space<vmem>>, vector<4x16xf32>,
    %87 = vector.extract_strided_slice %2 {offsets = [1, 0, 192], sizes = [1, 4, 16], strides = [1, 1, 1]} : vector<2x4x256xf32> to vector<1x4x16xf32>
    %88 = vector.shape_cast %87 : vector<1x4x16xf32> to vector<4x16xf32>
    %c0_32 = arith.constant 0 : index
    %c619 = arith.constant 619 : index
    %89 = vector.load %arg5[%c0_32, %c619] : memref<4x896xf32, #tpu.memory_space<vmem>>, vector<4x16xf32>
    tpu.vector_store %arg5[%c0_32, %c619], %88 {strides = array<i32>} : memref<4x896xf32, #tpu.memory_space<vmem>>, vector<4x16xf32>,
    %90 = vector.extract_strided_slice %2 {offsets = [1, 0, 208], sizes = [1, 4, 16], strides = [1, 1, 1]} : vector<2x4x256xf32> to vector<1x4x16xf32>
    %91 = vector.shape_cast %90 : vector<1x4x16xf32> to vector<4x16xf32>
    %c0_33 = arith.constant 0 : index
    %c637 = arith.constant 637 : index
    %92 = vector.load %arg5[%c0_33, %c637] : memref<4x896xf32, #tpu.memory_space<vmem>>, vector<4x16xf32>
    tpu.vector_store %arg5[%c0_33, %c637], %91 {strides = array<i32>} : memref<4x896xf32, #tpu.memory_space<vmem>>, vector<4x16xf32>,
    %93 = vector.extract_strided_slice %2 {offsets = [1, 0, 224], sizes = [1, 4, 16], strides = [1, 1, 1]} : vector<2x4x256xf32> to vector<1x4x16xf32>
    %94 = vector.shape_cast %93 : vector<1x4x16xf32> to vector<4x16xf32>
    %c0_34 = arith.constant 0 : index
    %c655 = arith.constant 655 : index
    %95 = vector.load %arg5[%c0_34, %c655] : memref<4x896xf32, #tpu.memory_space<vmem>>, vector<4x16xf32>
    tpu.vector_store %arg5[%c0_34, %c655], %94 {strides = array<i32>} : memref<4x896xf32, #tpu.memory_space<vmem>>, vector<4x16xf32>,
    %96 = vector.extract_strided_slice %2 {offsets = [1, 0, 240], sizes = [1, 4, 16], strides = [1, 1, 1]} : vector<2x4x256xf32> to vector<1x4x16xf32>
    %97 = vector.shape_cast %96 : vector<1x4x16xf32> to vector<4x16xf32>
    %c0_35 = arith.constant 0 : index
    %c673 = arith.constant 673 : index
    %98 = vector.load %arg5[%c0_35, %c673] : memref<4x896xf32, #tpu.memory_space<vmem>>, vector<4x16xf32>
    tpu.vector_store %arg5[%c0_35, %c673], %97 {strides = array<i32>} : memref<4x896xf32, #tpu.memory_space<vmem>>, vector<4x16xf32>,
    %c0_36 = arith.constant 0 : index
    %c0_37 = arith.constant 0 : index
    %99 = vector.load %arg5[%c0_36, %c0_37] : memref<4x896xf32, #tpu.memory_space<vmem>>, vector<4x896xf32>
    %100 = vector.extract_strided_slice %99 {offsets = [0, 0], sizes = [4, 768], strides = [1, 1]} : vector<4x896xf32> to vector<4x768xf32>
    %101 = vector.extract_strided_slice %99 {offsets = [0, 1], sizes = [4, 768], strides = [1, 1]} : vector<4x896xf32> to vector<4x768xf32>
    %102 = vector.extract_strided_slice %99 {offsets = [0, 2], sizes = [4, 768], strides = [1, 1]} : vector<4x896xf32> to vector<4x768xf32>
    %103 = vector.extract_strided_slice %99 {offsets = [0, 18], sizes = [4, 768], strides = [1, 1]} : vector<4x896xf32> to vector<4x768xf32>
    %104 = vector.extract_strided_slice %99 {offsets = [0, 19], sizes = [4, 768], strides = [1, 1]} : vector<4x896xf32> to vector<4x768xf32>
    %105 = vector.extract_strided_slice %99 {offsets = [0, 20], sizes = [4, 768], strides = [1, 1]} : vector<4x896xf32> to vector<4x768xf32>
    %106 = vector.extract_strided_slice %99 {offsets = [0, 36], sizes = [4, 768], strides = [1, 1]} : vector<4x896xf32> to vector<4x768xf32>
    %107 = vector.extract_strided_slice %99 {offsets = [0, 37], sizes = [4, 768], strides = [1, 1]} : vector<4x896xf32> to vector<4x768xf32>
    %108 = vector.extract_strided_slice %99 {offsets = [0, 38], sizes = [4, 768], strides = [1, 1]} : vector<4x896xf32> to vector<4x768xf32>
    %109 = tpu.concatenate %100, %101, %102, %103, %104, %105, %106, %107, %108 in 0 : vector<4x768xf32>, vector<4x768xf32>, vector<4x768xf32>, vector<4x768xf32>, vector<4x768xf32>, vector<4x768xf32>, vector<4x768xf32>, vector<4x768xf32>, vector<4x768xf32> -> vector<36x768xf32>
    %110 = arith.truncf %109 : vector<36x768xf32> to vector<36x768xbf16>
    %c0_38 = arith.constant 0 : index
    %c0_39 = arith.constant 0 : index
    %111 = vector.load %arg2[%c0_38, %c0_39] : memref<8x36xbf16, #tpu.memory_space<vmem>>, vector<8x36xbf16>
    %cst_40 = arith.constant dense<0.000000e+00> : vector<8x768xf32>
    %112 = tpu.matmul %111, %110, %cst_40 {dimension_numbers = #tpu.dot_dimension_numbers<[1], [0], [0], [1], [0, 0, 1, 1], [], []>} : vector<8x36xbf16>, vector<36x768xbf16>, vector<8x768xf32> -> vector<8x768xf32>
    %c0_41 = arith.constant 0 : index
    %c0_42 = arith.constant 0 : index
    %113 = vector.load %arg3[%c0_41, %c0_42] : memref<8x1xf32, #tpu.memory_space<vmem>>, vector<8x1xf32>
    %114 = vector.broadcast %113 : vector<8x1xf32> to vector<8x768xf32>
    %115 = arith.addf %112, %114 : vector<8x768xf32>
    %cst_43 = arith.constant 0.000000e+00 : f32
    %116 = vector.broadcast %cst_43 : f32 to vector<8x768xf32>
    %117 = arith.maximumf %115, %116 : vector<8x768xf32>
    %118 = vector.extract_strided_slice %117 {offsets = [0, 0], sizes = [8, 384], strides = [1, 1]} : vector<8x768xf32> to vector<8x384xf32>
    %c0_44 = arith.constant 0 : index
    %c0_45 = arith.constant 0 : index
    %c0_46 = arith.constant 0 : index
    %119 = vector.load %arg4[%c0_44, %c0_45, %c0_46] : memref<2x8x384xf32, #tpu.memory_space<vmem>>, vector<1x8x384xf32>
    %120 = vector.shape_cast %119 : vector<1x8x384xf32> to vector<8x384xf32>
    %121 = vector.shape_cast %118 : vector<8x384xf32> to vector<1x8x384xf32>
    tpu.vector_store %arg4[%c0_44, %c0_45, %c0_46], %121 {strides = array<i32>} : memref<2x8x384xf32, #tpu.memory_space<vmem>>, vector<1x8x384xf32>,
    %122 = vector.extract_strided_slice %117 {offsets = [0, 384], sizes = [8, 384], strides = [1, 1]} : vector<8x768xf32> to vector<8x384xf32>
    %c1 = arith.constant 1 : index
    %c0_47 = arith.constant 0 : index
    %c0_48 = arith.constant 0 : index
    %123 = vector.load %arg4[%c1, %c0_47, %c0_48] : memref<2x8x384xf32, #tpu.memory_space<vmem>>, vector<1x8x384xf32>
    %124 = vector.shape_cast %123 : vector<1x8x384xf32> to vector<8x384xf32>
    %125 = vector.shape_cast %122 : vector<8x384xf32> to vector<1x8x384xf32>
    tpu.vector_store %arg4[%c1, %c0_47, %c0_48], %125 {strides = array<i32>} : memref<2x8x384xf32, #tpu.memory_space<vmem>>, vector<1x8x384xf32>,
    return
  }
  func.func @transform_0(%arg0: i32) -> (i32, i32, i32) {
    %c0_i32 = arith.constant 0 : i32
    %c0_i32_0 = arith.constant 0 : i32
    %c0_i32_1 = arith.constant 0 : i32
    %c0_i32_2 = arith.constant 0 : i32
    return %c0_i32, %c0_i32_0, %c0_i32_1 : i32, i32, i32
  }
  func.func @transform_1(%arg0: i32) -> (i32, i32) {
    %c0_i32 = arith.constant 0 : i32
    %c0_i32_0 = arith.constant 0 : i32
    %c0_i32_1 = arith.constant 0 : i32
    return %c0_i32, %c0_i32_0 : i32, i32
  }
  func.func @transform_2(%arg0: i32) -> (i32, i32) {
    %c0_i32 = arith.constant 0 : i32
    %c0_i32_0 = arith.constant 0 : i32
    %c0_i32_1 = arith.constant 0 : i32
    return %c0_i32, %c0_i32_0 : i32, i32
  }
  func.func @transform_3(%arg0: i32) -> (i32, i32, i32) {
    %c0_i32 = arith.constant 0 : i32
    %c0_i32_0 = arith.constant 0 : i32
    %c0_i32_1 = arith.constant 0 : i32
    %c0_i32_2 = arith.constant 0 : i32
    return %c0_i32, %c0_i32_0, %c0_i32_1 : i32, i32, i32
  }
}

</mosaic_0001>

<llo_original>
// kernel: conv2d_block_forward.1
$region0: #{conv2d_block_forward.1}
  #allocation0 [shape = 'u32[]', space=smem, size = 0x4, offset = 0x4, fixed_abs, tag = 'smem constant byte address 0x4 - core index']
  #allocation1 [shape = 'u32[72,128]{1,0:T(1,128)}', space=vmem, size = 0x9000, scoped, tag = 'internal scratch']
  #allocation2 [shape = 'f32[4,896]{1,0:T(4,128)}', space=vmem, size = 0x3800, scoped, tag = 'scratch operand']
  %s0 = inlined_call_operand.vmem [shape: f32[2,4,256], index: 0, kind: input, shape index: {}]
  %s1 = inlined_call_operand.vmem [shape: bf16[8,36], index: 1, kind: input, shape index: {}]
  %s2 = inlined_call_operand.vmem [shape: f32[8,1], index: 2, kind: input, shape index: {}]
  %s3 = inlined_call_operand.vmem [shape: f32[2,8,384], index: 3, kind: output, shape index: {}]
  %s4 = sld [smem:[#allocation0]]
  $region22: #{conv2d_block_forward.1} parent=0
    _
  %s6 = ssub.s32 1, %s4
  %s7 = scalar_select 0, %s6, %s4
  // Predicated region
  $region2: #{conv2d_block_forward.1} parent=0 // pred_check
    _
  $region3: #{conv2d_block_forward.1} parent=0 // pred_check_branch
    %9 = sbr.rel (0) target = $region5
  $region4: #{conv2d_block_forward.1} parent=0 // pred_region
    _
  $region5: #{conv2d_block_forward.1} parent=0 // pred_fallthru
    _
  // Predicated region
  $region6: #{conv2d_block_forward.1} parent=0 // pred_check
    _
  $region7: #{conv2d_block_forward.1} parent=0 // pred_check_branch
    %11 = sbr.rel (0) target = $region9
  $region8: #{conv2d_block_forward.1} parent=0 // pred_region
    _
  $region9: #{conv2d_block_forward.1} parent=0 // pred_fallthru
    _
  // Predicated region
  $region10: #{conv2d_block_forward.1} parent=0 // pred_check
    _
  $region11: #{conv2d_block_forward.1} parent=0 // pred_check_branch
    %13 = sbr.rel (0) target = $region13
  $region12: #{conv2d_block_forward.1} parent=0 // pred_region
    _
  $region13: #{conv2d_block_forward.1} parent=0 // pred_fallthru
    _
  %15 = vst [vmem:[#allocation2] sm:$0xff] 0.0
  %16 = vst [vmem:[#allocation2 + $0x8] sm:$0xff] 0.0
  %17 = vst [vmem:[#allocation2 + $0x10] sm:$0xff] 0.0
  %18 = vst [vmem:[#allocation2 + $0x18] sm:$0xf] 0.0
  %v19 = vld [vmem:[%s0] sm:$0xff]
  %v20 = vld [vmem:[%s0 + $0x8] sm:$0xff]
  %22 = vrot.lane.b32.xlu0 %v19, 19
  %v23 = vpop.permute.xlu0 %22
  %vm25 = vcmask 281752
  %26 = vst.msk [vmem:[#allocation2] sm:$0xf] %vm25, %v23
  %27 = vrot.lane.b32.xlu0 %v19, 21
  %v28 = vpop.permute.xlu0 %27
  %vm30 = vcmask 429352
  %31 = vst.msk [vmem:[#allocation2] sm:$0xf] %vm30, %v28
  %32 = vrot.lane.b32.xlu0 %v19, 23
  %v33 = vpop.permute.xlu0 %32
  %vm35 = vcmask 576952
  %36 = vst.msk [vmem:[#allocation2] sm:$0xf] %vm35, %v33
  %37 = vrot.lane.b32.xlu0 %v19, 25
  %v38 = vpop.permute.xlu0 %37
  %vm40 = vcmask 724552
  %41 = vst.msk [vmem:[#allocation2] sm:$0xf] %vm40, %v38
  %42 = vrot.lane.b32.xlu0 %v19, 27
  %v43 = vpop.permute.xlu0 %42
  %vm45 = vcmask 872152
  %46 = vst.msk [vmem:[#allocation2] sm:$0xf] %vm45, %v43
  %47 = vrot.lane.b32.xlu0 %v19, 29
  %v48 = vpop.permute.xlu0 %47
  %vm50 = vcmask 1019752
  %51 = vst.msk [vmem:[#allocation2] sm:$0xf] %vm50, %v48
  %52 = vrot.lane.b32.xlu0 %v19, 31
  %v53 = vpop.permute.xlu0 %52
  %v54 = vrot.slane %v53, 4
  %vm55 = vcmask 252928
  %v56 = vsel %vm55, %v54, %v53
  %vm58 = vcmask 1044472
  %vm59 = vcmask 121860
  %vm60 = vmor %vm59, %vm58
  %61 = vst.msk [vmem:[#allocation2] sm:$0xff] %vm60, %v56
  %62 = vrot.lane.b32.xlu0 %v19, 33
  %v63 = vpop.permute.xlu0 %62
  %vm65 = vcmask 265352
  %66 = vst.msk [vmem:[#allocation2 + $0x4] sm:$0xf] %vm65, %v63
  %v67 = vrot.slane %v19, 4
  %68 = vrot.lane.b32.xlu0 %v67, 35
  %v69 = vpop.permute.xlu0 %68
  %vm71 = vcmask 412952
  %72 = vst.msk [vmem:[#allocation2 + $0x4] sm:$0xf] %vm71, %v69
  %73 = vrot.lane.b32.xlu0 %v19, 112
  %v74 = vpop.permute.xlu0 %73
  %v75 = vrot.slane %v74, 4
  %76 = vrot.lane.b32.xlu0 %v75, 53
  %v77 = vpop.permute.xlu0 %76
  %vm79 = vcmask 560552
  %80 = vst.msk [vmem:[#allocation2 + $0x4] sm:$0xf] %vm79, %v77
  %81 = vrot.lane.b32.xlu0 %v19, 96
  %v82 = vpop.permute.xlu0 %81
  %v83 = vrot.slane %v82, 4
  %84 = vrot.lane.b32.xlu0 %v83, 71
  %v85 = vpop.permute.xlu0 %84
  %vm87 = vcmask 708152
  %88 = vst.msk [vmem:[#allocation2 + $0x4] sm:$0xf] %vm87, %v85
  %89 = vrot.lane.b32.xlu0 %v19, 80
  %v90 = vpop.permute.xlu0 %89
  %v91 = vrot.slane %v90, 4
  %92 = vrot.lane.b32.xlu0 %v91, 89
  %v93 = vpop.permute.xlu0 %92
  %vm95 = vcmask 855752
  %96 = vst.msk [vmem:[#allocation2 + $0x4] sm:$0xf] %vm95, %v93
  %97 = vrot.lane.b32.xlu0 %v19, 64
  %v98 = vpop.permute.xlu0 %97
  %v99 = vrot.slane %v98, 4
  %100 = vrot.lane.b32.xlu0 %v99, 107
  %v101 = vpop.permute.xlu0 %100
  %vm103 = vcmask 1003352
  %104 = vst.msk [vmem:[#allocation2 + $0x4] sm:$0xf] %vm103, %v101
  %105 = vrot.lane.b32.xlu0 %v19, 48
  %v106 = vpop.permute.xlu0 %105
  %v107 = vrot.slane %v106, 4
  %108 = vrot.lane.b32.xlu0 %v107, 125
  %v109 = vpop.permute.xlu0 %108
  %v110 = vrot.slane %v109, 4
  %vm111 = vcmask 1022976
  %v112 = vsel %vm111, %v110, %v109
  %vm114 = vcmask 1044456
  %vm115 = vcmask 105476
  %vm116 = vmor %vm115, %vm114
  %117 = vst.msk [vmem:[#allocation2 + $0x4] sm:$0xff] %vm116, %v112
  %118 = vrot.lane.b32.xlu0 %v19, 32
  %v119 = vpop.permute.xlu0 %118
  %v120 = vrot.slane %v119, 4
  %121 = vrot.lane.b32.xlu0 %v120, 15
  %v122 = vpop.permute.xlu0 %121
  %vm124 = vcmask 248952
  %125 = vst.msk [vmem:[#allocation2 + $0x8] sm:$0xf] %vm124, %v122
  %126 = vrot.lane.b32.xlu0 %v19, 16
  %v127 = vpop.permute.xlu0 %126
  %v128 = vrot.slane %v127, 4
  %129 = vrot.lane.b32.xlu0 %v128, 33
  %v130 = vpop.permute.xlu0 %129
  %vm132 = vcmask 396552
  %133 = vst.msk [vmem:[#allocation2 + $0x8] sm:$0xf] %vm132, %v130
  %135 = vrot.lane.b32.xlu0 %v20, 19
  %v136 = vpop.permute.xlu0 %135
  %138 = vst.msk [vmem:[#allocation2 + $0xc] sm:$0xf] %vm25, %v136
  %139 = vrot.lane.b32.xlu0 %v20, 21
  %v140 = vpop.permute.xlu0 %139
  %142 = vst.msk [vmem:[#allocation2 + $0xc] sm:$0xf] %vm30, %v140
  %143 = vrot.lane.b32.xlu0 %v20, 23
  %v144 = vpop.permute.xlu0 %143
  %146 = vst.msk [vmem:[#allocation2 + $0xc] sm:$0xf] %vm35, %v144
  %147 = vrot.lane.b32.xlu0 %v20, 25
  %v148 = vpop.permute.xlu0 %147
  %150 = vst.msk [vmem:[#allocation2 + $0xc] sm:$0xf] %vm40, %v148
  %151 = vrot.lane.b32.xlu0 %v20, 27
  %v152 = vpop.permute.xlu0 %151
  %154 = vst.msk [vmem:[#allocation2 + $0xc] sm:$0xf] %vm45, %v152
  %155 = vrot.lane.b32.xlu0 %v20, 29
  %v156 = vpop.permute.xlu0 %155
  %158 = vst.msk [vmem:[#allocation2 + $0xc] sm:$0xf] %vm50, %v156
  %159 = vrot.lane.b32.xlu0 %v20, 31
  %v160 = vpop.permute.xlu0 %159
  %v161 = vrot.slane %v160, 4
  %v162 = vsel %vm55, %v161, %v160
  %164 = vst.msk [vmem:[#allocation2 + $0xc] sm:$0xff] %vm60, %v162
  %165 = vrot.lane.b32.xlu0 %v20, 33
  %v166 = vpop.permute.xlu0 %165
  %168 = vst.msk [vmem:[#allocation2 + $0x10] sm:$0xf] %vm65, %v166
  %v169 = vrot.slane %v20, 4
  %170 = vrot.lane.b32.xlu0 %v169, 35
  %v171 = vpop.permute.xlu0 %170
  %173 = vst.msk [vmem:[#allocation2 + $0x10] sm:$0xf] %vm71, %v171
  %174 = vrot.lane.b32.xlu0 %v20, 112
  %v175 = vpop.permute.xlu0 %174
  %v176 = vrot.slane %v175, 4
  %177 = vrot.lane.b32.xlu0 %v176, 53
  %v178 = vpop.permute.xlu0 %177
  %180 = vst.msk [vmem:[#allocation2 + $0x10] sm:$0xf] %vm79, %v178
  %181 = vrot.lane.b32.xlu0 %v20, 96
  %v182 = vpop.permute.xlu0 %181
  %v183 = vrot.slane %v182, 4
  %184 = vrot.lane.b32.xlu0 %v183, 71
  %v185 = vpop.permute.xlu0 %184
  %187 = vst.msk [vmem:[#allocation2 + $0x10] sm:$0xf] %vm87, %v185
  %188 = vrot.lane.b32.xlu0 %v20, 80
  %v189 = vpop.permute.xlu0 %188
  %v190 = vrot.slane %v189, 4
  %191 = vrot.lane.b32.xlu0 %v190, 89
  %v192 = vpop.permute.xlu0 %191
  %194 = vst.msk [vmem:[#allocation2 + $0x10] sm:$0xf] %vm95, %v192
  %195 = vrot.lane.b32.xlu0 %v20, 64
  %v196 = vpop.permute.xlu0 %195
  %v197 = vrot.slane %v196, 4
  %198 = vrot.lane.b32.xlu0 %v197, 107
  %v199 = vpop.permute.xlu0 %198
  %201 = vst.msk [vmem:[#allocation2 + $0x10] sm:$0xf] %vm103, %v199
  %202 = vrot.lane.b32.xlu0 %v20, 48
  %v203 = vpop.permute.xlu0 %202
  %v204 = vrot.slane %v203, 4
  %205 = vrot.lane.b32.xlu0 %v204, 125
  %v206 = vpop.permute.xlu0 %205
  %v207 = vrot.slane %v206, 4
  %v208 = vsel %vm111, %v207, %v206
  %210 = vst.msk [vmem:[#allocation2 + $0x10] sm:$0xff] %vm116, %v208
  %211 = vrot.lane.b32.xlu0 %v20, 32
  %v212 = vpop.permute.xlu0 %211
  %v213 = vrot.slane %v212, 4
  %214 = vrot.lane.b32.xlu0 %v213, 15
  %v215 = vpop.permute.xlu0 %214
  %217 = vst.msk [vmem:[#allocation2 + $0x14] sm:$0xf] %vm124, %v215
  %218 = vrot.lane.b32.xlu0 %v20, 16
  %v219 = vpop.permute.xlu0 %218
  %v220 = vrot.slane %v219, 4
  %221 = vrot.lane.b32.xlu0 %v220, 33
  %v222 = vpop.permute.xlu0 %221
  %224 = vst.msk [vmem:[#allocation2 + $0x14] sm:$0xf] %vm132, %v222
  %v225 = vld [vmem:[#allocation2] sm:$0xff]
  %v226 = vld [vmem:[#allocation2 + $0x8] sm:$0xff]
  %v227 = vld [vmem:[#allocation2 + $0x10] sm:$0xff]
  %v228 = vld [vmem:[#allocation2 + $0x18] sm:$0xf]
  %232 = vst [vmem:[#allocation1] ss:$2 sm:$0xff] %v225
  %s233 = scalar_lea.vmem [#allocation1], 16
  %234 = vst [vmem:[%s233] ss:$2 sm:$0xff] %v226
  %s235 = scalar_lea.vmem [#allocation1], 32
  %236 = vst [vmem:[%s235] ss:$2 sm:$0xff] %v227
  %v237 = vld.sshfl [vmem:[#allocation1] sm:$0xff pattern:$0x75316420]
  %v238 = vld.sshfl [vmem:[#allocation1 + $0x8] sm:$0xff pattern:$0x75316420]
  %v239 = vld.sshfl [vmem:[#allocation1 + $0x10] sm:$0xff pattern:$0x75316420]
  %v240 = vld.sshfl [vmem:[#allocation1 + $0x18] sm:$0xff pattern:$0x75316420]
  %v241 = vld.sshfl [vmem:[#allocation1 + $0x20] sm:$0xff pattern:$0x75316420]
  %v242 = vld.sshfl [vmem:[#allocation1 + $0x28] sm:$0xff pattern:$0x75316420]
  %s250 = scalar_lea.vmem [#allocation1], 1
  %251 = vst [vmem:[%s250] ss:$2 sm:$0xff] %v225
  %s252 = scalar_lea.vmem [#allocation1], 17
  %253 = vst [vmem:[%s252] ss:$2 sm:$0xff] %v226
  %s254 = scalar_lea.vmem [#allocation1], 33
  %255 = vst [vmem:[%s254] ss:$2 sm:$0xff] %v227
  %s256 = scalar_lea.vmem [#allocation1], 49
  %257 = vst [vmem:[%s256] ss:$2 sm:$0xff] %v228
  %v258 = vld.sshfl [vmem:[#allocation1] sm:$0xff pattern:$0x75316420]
  %v259 = vld.sshfl [vmem:[#allocation1 + $0x8] sm:$0xff pattern:$0x75316420]
  %v260 = vld.sshfl [vmem:[#allocation1 + $0x10] sm:$0xff pattern:$0x75316420]
  %v261 = vld.sshfl [vmem:[#allocation1 + $0x18] sm:$0xff pattern:$0x75316420]
  %v262 = vld.sshfl [vmem:[#allocation1 + $0x20] sm:$0xff pattern:$0x75316420]
  %v263 = vld.sshfl [vmem:[#allocation1 + $0x28] sm:$0xff pattern:$0x75316420]
  %v264 = vld.sshfl [vmem:[#allocation1 + $0x30] sm:$0xff pattern:$0x75316420]
  %265 = vrot.lane.b32.xlu0 %v258, 127
  %v266 = vpop.permute.xlu0 %265
  %267 = vrot.lane.b32.xlu0 %v259, 127
  %v268 = vpop.permute.xlu0 %267
  %269 = vrot.lane.b32.xlu0 %v260, 127
  %v270 = vpop.permute.xlu0 %269
  %271 = vrot.lane.b32.xlu0 %v261, 127
  %v272 = vpop.permute.xlu0 %271
  %273 = vrot.lane.b32.xlu0 %v262, 127
  %v274 = vpop.permute.xlu0 %273
  %275 = vrot.lane.b32.xlu0 %v263, 127
  %v276 = vpop.permute.xlu0 %275
  %277 = vrot.lane.b32.xlu0 %v264, 127
  %v278 = vpop.permute.xlu0 %277
  %vm279 = vcmask 1039360
  %v280 = vsel %vm279, %v266, %v268
  %v281 = vsel %vm279, %v268, %v270
  %v282 = vsel %vm279, %v270, %v272
  %v283 = vsel %vm279, %v272, %v274
  %v284 = vsel %vm279, %v274, %v276
  %v285 = vsel %vm279, %v276, %v278
  %292 = vst [vmem:[#allocation1] ss:$2 sm:$0xff] %v225
  %s293 = scalar_lea.vmem [#allocation1], 16
  %294 = vst [vmem:[%s293] ss:$2 sm:$0xff] %v226
  %s295 = scalar_lea.vmem [#allocation1], 32
  %296 = vst [vmem:[%s295] ss:$2 sm:$0xff] %v227
  %s297 = scalar_lea.vmem [#allocation1], 48
  %298 = vst [vmem:[%s297] ss:$2 sm:$0xff] %v228
  %v299 = vld.sshfl [vmem:[#allocation1] sm:$0xff pattern:$0x75316420]
  %v300 = vld.sshfl [vmem:[#allocation1 + $0x8] sm:$0xff pattern:$0x75316420]
  %v301 = vld.sshfl [vmem:[#allocation1 + $0x10] sm:$0xff pattern:$0x75316420]
  %v302 = vld.sshfl [vmem:[#allocation1 + $0x18] sm:$0xff pattern:$0x75316420]
  %v303 = vld.sshfl [vmem:[#allocation1 + $0x20] sm:$0xff pattern:$0x75316420]
  %v304 = vld.sshfl [vmem:[#allocation1 + $0x28] sm:$0xff pattern:$0x75316420]
  %v305 = vld.sshfl [vmem:[#allocation1 + $0x30] sm:$0xff pattern:$0x75316420]
  %306 = vrot.lane.b32.xlu0 %v299, 126
  %v307 = vpop.permute.xlu0 %306
  %308 = vrot.lane.b32.xlu0 %v300, 126
  %v309 = vpop.permute.xlu0 %308
  %310 = vrot.lane.b32.xlu0 %v301, 126
  %v311 = vpop.permute.xlu0 %310
  %312 = vrot.lane.b32.xlu0 %v302, 126
  %v313 = vpop.permute.xlu0 %312
  %314 = vrot.lane.b32.xlu0 %v303, 126
  %v315 = vpop.permute.xlu0 %314
  %316 = vrot.lane.b32.xlu0 %v304, 126
  %v317 = vpop.permute.xlu0 %316
  %318 = vrot.lane.b32.xlu0 %v305, 126
  %v319 = vpop.permute.xlu0 %318
  %vm320 = vcmask 1031168
  %v321 = vsel %vm320, %v307, %v309
  %v322 = vsel %vm320, %v309, %v311
  %v323 = vsel %vm320, %v311, %v313
  %v324 = vsel %vm320, %v313, %v315
  %v325 = vsel %vm320, %v315, %v317
  %v326 = vsel %vm320, %v317, %v319
  %s333 = scalar_lea.vmem [#allocation1], 1
  %334 = vst [vmem:[%s333] ss:$2 sm:$0xff] %v225
  %s335 = scalar_lea.vmem [#allocation1], 17
  %336 = vst [vmem:[%s335] ss:$2 sm:$0xff] %v226
  %s337 = scalar_lea.vmem [#allocation1], 33
  %338 = vst [vmem:[%s337] ss:$2 sm:$0xff] %v227
  %s339 = scalar_lea.vmem [#allocation1], 49
  %340 = vst [vmem:[%s339] ss:$2 sm:$0xff] %v228
  %v341 = vld.sshfl [vmem:[#allocation1] sm:$0xff pattern:$0x75316420]
  %v342 = vld.sshfl [vmem:[#allocation1 + $0x8] sm:$0xff pattern:$0x75316420]
  %v343 = vld.sshfl [vmem:[#allocation1 + $0x10] sm:$0xff pattern:$0x75316420]
  %v344 = vld.sshfl [vmem:[#allocation1 + $0x18] sm:$0xff pattern:$0x75316420]
  %v345 = vld.sshfl [vmem:[#allocation1 + $0x20] sm:$0xff pattern:$0x75316420]
  %v346 = vld.sshfl [vmem:[#allocation1 + $0x28] sm:$0xff pattern:$0x75316420]
  %v347 = vld.sshfl [vmem:[#allocation1 + $0x30] sm:$0xff pattern:$0x75316420]
  %348 = vrot.lane.b32.xlu0 %v341, 110
  %v349 = vpop.permute.xlu0 %348
  %350 = vrot.lane.b32.xlu0 %v342, 110
  %v351 = vpop.permute.xlu0 %350
  %352 = vrot.lane.b32.xlu0 %v343, 110
  %v353 = vpop.permute.xlu0 %352
  %354 = vrot.lane.b32.xlu0 %v344, 110
  %v355 = vpop.permute.xlu0 %354
  %356 = vrot.lane.b32.xlu0 %v345, 110
  %v357 = vpop.permute.xlu0 %356
  %358 = vrot.lane.b32.xlu0 %v346, 110
  %v359 = vpop.permute.xlu0 %358
  %360 = vrot.lane.b32.xlu0 %v347, 110
  %v361 = vpop.permute.xlu0 %360
  %vm362 = vcmask 900096
  %v363 = vsel %vm362, %v349, %v351
  %v364 = vsel %vm362, %v351, %v353
  %v365 = vsel %vm362, %v353, %v355
  %v366 = vsel %vm362, %v355, %v357
  %v367 = vsel %vm362, %v357, %v359
  %v368 = vsel %vm362, %v359, %v361
  %375 = vst [vmem:[#allocation1] ss:$2 sm:$0xff] %v225
  %s376 = scalar_lea.vmem [#allocation1], 16
  %377 = vst [vmem:[%s376] ss:$2 sm:$0xff] %v226
  %s378 = scalar_lea.vmem [#allocation1], 32
  %379 = vst [vmem:[%s378] ss:$2 sm:$0xff] %v227
  %s380 = scalar_lea.vmem [#allocation1], 48
  %381 = vst [vmem:[%s380] ss:$2 sm:$0xff] %v228
  %v382 = vld.sshfl [vmem:[#allocation1] sm:$0xff pattern:$0x75316420]
  %v383 = vld.sshfl [vmem:[#allocation1 + $0x8] sm:$0xff pattern:$0x75316420]
  %v384 = vld.sshfl [vmem:[#allocation1 + $0x10] sm:$0xff pattern:$0x75316420]
  %v385 = vld.sshfl [vmem:[#allocation1 + $0x18] sm:$0xff pattern:$0x75316420]
  %v386 = vld.sshfl [vmem:[#allocation1 + $0x20] sm:$0xff pattern:$0x75316420]
  %v387 = vld.sshfl [vmem:[#allocation1 + $0x28] sm:$0xff pattern:$0x75316420]
  %v388 = vld.sshfl [vmem:[#allocation1 + $0x30] sm:$0xff pattern:$0x75316420]
  %389 = vrot.lane.b32.xlu0 %v382, 109
  %v390 = vpop.permute.xlu0 %389
  %391 = vrot.lane.b32.xlu0 %v383, 109
  %v392 = vpop.permute.xlu0 %391
  %393 = vrot.lane.b32.xlu0 %v384, 109
  %v394 = vpop.permute.xlu0 %393
  %395 = vrot.lane.b32.xlu0 %v385, 109
  %v396 = vpop.permute.xlu0 %395
  %397 = vrot.lane.b32.xlu0 %v386, 109
  %v398 = vpop.permute.xlu0 %397
  %399 = vrot.lane.b32.xlu0 %v387, 109
  %v400 = vpop.permute.xlu0 %399
  %401 = vrot.lane.b32.xlu0 %v388, 109
  %v402 = vpop.permute.xlu0 %401
  %vm403 = vcmask 891904
  %v404 = vsel %vm403, %v390, %v392
  %v405 = vsel %vm403, %v392, %v394
  %v406 = vsel %vm403, %v394, %v396
  %v407 = vsel %vm403, %v396, %v398
  %v408 = vsel %vm403, %v398, %v400
  %v409 = vsel %vm403, %v400, %v402
  %s416 = scalar_lea.vmem [#allocation1], 1
  %417 = vst [vmem:[%s416] ss:$2 sm:$0xff] %v225
  %s418 = scalar_lea.vmem [#allocation1], 17
  %419 = vst [vmem:[%s418] ss:$2 sm:$0xff] %v226
  %s420 = scalar_lea.vmem [#allocation1], 33
  %421 = vst [vmem:[%s420] ss:$2 sm:$0xff] %v227
  %s422 = scalar_lea.vmem [#allocation1], 49
  %423 = vst [vmem:[%s422] ss:$2 sm:$0xff] %v228
  %v424 = vld.sshfl [vmem:[#allocation1] sm:$0xff pattern:$0x75316420]
  %v425 = vld.sshfl [vmem:[#allocation1 + $0x8] sm:$0xff pattern:$0x75316420]
  %v426 = vld.sshfl [vmem:[#allocation1 + $0x10] sm:$0xff pattern:$0x75316420]
  %v427 = vld.sshfl [vmem:[#allocation1 + $0x18] sm:$0xff pattern:$0x75316420]
  %v428 = vld.sshfl [vmem:[#allocation1 + $0x20] sm:$0xff pattern:$0x75316420]
  %v429 = vld.sshfl [vmem:[#allocation1 + $0x28] sm:$0xff pattern:$0x75316420]
  %v430 = vld.sshfl [vmem:[#allocation1 + $0x30] sm:$0xff pattern:$0x75316420]
  %431 = vrot.lane.b32.xlu0 %v424, 108
  %v432 = vpop.permute.xlu0 %431
  %433 = vrot.lane.b32.xlu0 %v425, 108
  %v434 = vpop.permute.xlu0 %433
  %435 = vrot.lane.b32.xlu0 %v426, 108
  %v436 = vpop.permute.xlu0 %435
  %437 = vrot.lane.b32.xlu0 %v427, 108
  %v438 = vpop.permute.xlu0 %437
  %439 = vrot.lane.b32.xlu0 %v428, 108
  %v440 = vpop.permute.xlu0 %439
  %441 = vrot.lane.b32.xlu0 %v429, 108
  %v442 = vpop.permute.xlu0 %441
  %443 = vrot.lane.b32.xlu0 %v430, 108
  %v444 = vpop.permute.xlu0 %443
  %vm445 = vcmask 883712
  %v446 = vsel %vm445, %v432, %v434
  %v447 = vsel %vm445, %v434, %v436
  %v448 = vsel %vm445, %v436, %v438
  %v449 = vsel %vm445, %v438, %v440
  %v450 = vsel %vm445, %v440, %v442
  %v451 = vsel %vm445, %v442, %v444
  %458 = vst [vmem:[#allocation1] ss:$2 sm:$0xff] %v225
  %s459 = scalar_lea.vmem [#allocation1], 16
  %460 = vst [vmem:[%s459] ss:$2 sm:$0xff] %v226
  %s461 = scalar_lea.vmem [#allocation1], 32
  %462 = vst [vmem:[%s461] ss:$2 sm:$0xff] %v227
  %s463 = scalar_lea.vmem [#allocation1], 48
  %464 = vst [vmem:[%s463] ss:$2 sm:$0xff] %v228
  %v465 = vld.sshfl [vmem:[#allocation1] sm:$0xff pattern:$0x75316420]
  %v466 = vld.sshfl [vmem:[#allocation1 + $0x8] sm:$0xff pattern:$0x75316420]
  %v467 = vld.sshfl [vmem:[#allocation1 + $0x10] sm:$0xff pattern:$0x75316420]
  %v468 = vld.sshfl [vmem:[#allocation1 + $0x18] sm:$0xff pattern:$0x75316420]
  %v469 = vld.sshfl [vmem:[#allocation1 + $0x20] sm:$0xff pattern:$0x75316420]
  %v470 = vld.sshfl [vmem:[#allocation1 + $0x28] sm:$0xff pattern:$0x75316420]
  %v471 = vld.sshfl [vmem:[#allocation1 + $0x30] sm:$0xff pattern:$0x75316420]
  %472 = vrot.lane.b32.xlu0 %v465, 92
  %v473 = vpop.permute.xlu0 %472
  %474 = vrot.lane.b32.xlu0 %v466, 92
  %v475 = vpop.permute.xlu0 %474
  %476 = vrot.lane.b32.xlu0 %v467, 92
  %v477 = vpop.permute.xlu0 %476
  %478 = vrot.lane.b32.xlu0 %v468, 92
  %v479 = vpop.permute.xlu0 %478
  %480 = vrot.lane.b32.xlu0 %v469, 92
  %v481 = vpop.permute.xlu0 %480
  %482 = vrot.lane.b32.xlu0 %v470, 92
  %v483 = vpop.permute.xlu0 %482
  %484 = vrot.lane.b32.xlu0 %v471, 92
  %v485 = vpop.permute.xlu0 %484
  %vm486 = vcmask 752640
  %v487 = vsel %vm486, %v473, %v475
  %v488 = vsel %vm486, %v475, %v477
  %v489 = vsel %vm486, %v477, %v479
  %v490 = vsel %vm486, %v479, %v481
  %v491 = vsel %vm486, %v481, %v483
  %v492 = vsel %vm486, %v483, %v485
  %s499 = scalar_lea.vmem [#allocation1], 1
  %500 = vst [vmem:[%s499] ss:$2 sm:$0xff] %v225
  %s501 = scalar_lea.vmem [#allocation1], 17
  %502 = vst [vmem:[%s501] ss:$2 sm:$0xff] %v226
  %s503 = scalar_lea.vmem [#allocation1], 33
  %504 = vst [vmem:[%s503] ss:$2 sm:$0xff] %v227
  %s505 = scalar_lea.vmem [#allocation1], 49
  %506 = vst [vmem:[%s505] ss:$2 sm:$0xff] %v228
  %v507 = vld.sshfl [vmem:[#allocation1] sm:$0xff pattern:$0x75316420]
  %v508 = vld.sshfl [vmem:[#allocation1 + $0x8] sm:$0xff pattern:$0x75316420]
  %v509 = vld.sshfl [vmem:[#allocation1 + $0x10] sm:$0xff pattern:$0x75316420]
  %v510 = vld.sshfl [vmem:[#allocation1 + $0x18] sm:$0xff pattern:$0x75316420]
  %v511 = vld.sshfl [vmem:[#allocation1 + $0x20] sm:$0xff pattern:$0x75316420]
  %v512 = vld.sshfl [vmem:[#allocation1 + $0x28] sm:$0xff pattern:$0x75316420]
  %v513 = vld.sshfl [vmem:[#allocation1 + $0x30] sm:$0xff pattern:$0x75316420]
  %514 = vrot.lane.b32.xlu0 %v507, 91
  %v515 = vpop.permute.xlu0 %514
  %516 = vrot.lane.b32.xlu0 %v508, 91
  %v517 = vpop.permute.xlu0 %516
  %518 = vrot.lane.b32.xlu0 %v509, 91
  %v519 = vpop.permute.xlu0 %518
  %520 = vrot.lane.b32.xlu0 %v510, 91
  %v521 = vpop.permute.xlu0 %520
  %522 = vrot.lane.b32.xlu0 %v511, 91
  %v523 = vpop.permute.xlu0 %522
  %524 = vrot.lane.b32.xlu0 %v512, 91
  %v525 = vpop.permute.xlu0 %524
  %526 = vrot.lane.b32.xlu0 %v513, 91
  %v527 = vpop.permute.xlu0 %526
  %vm528 = vcmask 744448
  %v529 = vsel %vm528, %v515, %v517
  %v530 = vsel %vm528, %v517, %v519
  %v531 = vsel %vm528, %v519, %v521
  %v532 = vsel %vm528, %v521, %v523
  %v533 = vsel %vm528, %v523, %v525
  %v534 = vsel %vm528, %v525, %v527
  %541 = vst [vmem:[#allocation1] ss:$2 sm:$0xff] %v225
  %s542 = scalar_lea.vmem [#allocation1], 16
  %543 = vst [vmem:[%s542] ss:$2 sm:$0xff] %v226
  %s544 = scalar_lea.vmem [#allocation1], 32
  %545 = vst [vmem:[%s544] ss:$2 sm:$0xff] %v227
  %s546 = scalar_lea.vmem [#allocation1], 48
  %547 = vst [vmem:[%s546] ss:$2 sm:$0xff] %v228
  %v548 = vld.sshfl [vmem:[#allocation1] sm:$0xff pattern:$0x75316420]
  %v549 = vld.sshfl [vmem:[#allocation1 + $0x8] sm:$0xff pattern:$0x75316420]
  %v550 = vld.sshfl [vmem:[#allocation1 + $0x10] sm:$0xff pattern:$0x75316420]
  %v551 = vld.sshfl [vmem:[#allocation1 + $0x18] sm:$0xff pattern:$0x75316420]
  %v552 = vld.sshfl [vmem:[#allocation1 + $0x20] sm:$0xff pattern:$0x75316420]
  %v553 = vld.sshfl [vmem:[#allocation1 + $0x28] sm:$0xff pattern:$0x75316420]
  %v554 = vld.sshfl [vmem:[#allocation1 + $0x30] sm:$0xff pattern:$0x75316420]
  %555 = vrot.lane.b32.xlu0 %v548, 90
  %v556 = vpop.permute.xlu0 %555
  %557 = vrot.lane.b32.xlu0 %v549, 90
  %v558 = vpop.permute.xlu0 %557
  %559 = vrot.lane.b32.xlu0 %v550, 90
  %v560 = vpop.permute.xlu0 %559
  %561 = vrot.lane.b32.xlu0 %v551, 90
  %v562 = vpop.permute.xlu0 %561
  %563 = vrot.lane.b32.xlu0 %v552, 90
  %v564 = vpop.permute.xlu0 %563
  %565 = vrot.lane.b32.xlu0 %v553, 90
  %v566 = vpop.permute.xlu0 %565
  %567 = vrot.lane.b32.xlu0 %v554, 90
  %v568 = vpop.permute.xlu0 %567
  %vm569 = vcmask 736256
  %v570 = vsel %vm569, %v556, %v558
  %v571 = vsel %vm569, %v558, %v560
  %v572 = vsel %vm569, %v560, %v562
  %v573 = vsel %vm569, %v562, %v564
  %v574 = vsel %vm569, %v564, %v566
  %v575 = vsel %vm569, %v566, %v568
  %vm582 = vcmask 1043456
  %v583 = vsel %vm582, %v237, %v280
  %v584 = vsel %vm582, %v238, %v281
  %v585 = vsel %vm582, %v239, %v282
  %v586 = vsel %vm582, %v240, %v283
  %v587 = vsel %vm582, %v241, %v284
  %v588 = vsel %vm582, %v242, %v285
  %v589 = vsel %vm582, %v321, %v363
  %v590 = vsel %vm582, %v322, %v364
  %v591 = vsel %vm582, %v323, %v365
  %v592 = vsel %vm582, %v324, %v366
  %v593 = vsel %vm582, %v325, %v367
  %v594 = vsel %vm582, %v326, %v368
  %v595 = vsel %vm582, %v404, %v446
  %v596 = vsel %vm582, %v405, %v447
  %v597 = vsel %vm582, %v406, %v448
  %v598 = vsel %vm582, %v407, %v449
  %v599 = vsel %vm582, %v408, %v450
  %v600 = vsel %vm582, %v409, %v451
  %v601 = vsel %vm582, %v487, %v529
  %v602 = vsel %vm582, %v488, %v530
  %v603 = vsel %vm582, %v489, %v531
  %v604 = vsel %vm582, %v490, %v532
  %v605 = vsel %vm582, %v491, %v533
  %v606 = vsel %vm582, %v492, %v534
  %v607 = vpack.c.bf16 %v589, %v583
  %v608 = vpack.c.bf16 %v590, %v584
  %v609 = vpack.c.bf16 %v591, %v585
  %v610 = vpack.c.bf16 %v592, %v586
  %v611 = vpack.c.bf16 %v593, %v587
  %v612 = vpack.c.bf16 %v594, %v588
  %v613 = vpack.c.bf16 %v601, %v595
  %v614 = vpack.c.bf16 %v602, %v596
  %v615 = vpack.c.bf16 %v603, %v597
  %v616 = vpack.c.bf16 %v604, %v598
  %v617 = vpack.c.bf16 %v605, %v599
  %v618 = vpack.c.bf16 %v606, %v600
  %v619 = vpack.c.bf16 %v570, %v570
  %v620 = vpack.c.bf16 %v571, %v571
  %v621 = vpack.c.bf16 %v572, %v572
  %v622 = vpack.c.bf16 %v573, %v573
  %v623 = vpack.c.bf16 %v574, %v574
  %v624 = vpack.c.bf16 %v575, %v575
  %v625 = vld [vmem:[%s1] sm:$0xf]
  %v626 = vld [vmem:[%s2] sm:$0xff]
  %628 = vset.pattern.permute.xlu0 0
  %629 = vperm.xlu0 %628, %v626
  %v630 = vpop.permute.xlu0 %629
  %vm632 = vcmask 293888
  %v634 = vsel %vm632, %v625, 0
  %vm636 = vcmask 1041408
  %v638 = vsel %vm636, %v619, 0
  %v641 = vsel %vm636, %v620, 0
  %v644 = vsel %vm636, %v621, 0
  %v647 = vsel %vm636, %v622, 0
  %v650 = vsel %vm636, %v623, 0
  %v653 = vsel %vm636, %v624, 0
  %655 = vmatpush.bf16.msra.mxu0 0
  %656 = vmatpush.bf16.msra.mxu0 0
  %657 = vmatpush.bf16.msra.mxu0 0
  %658 = vmatpush.bf16.msra.mxu0 0
  %659 = vmatpush.bf16.msra.mxu0 0
  %660 = vmatpush.bf16.msra.mxu0 %v638
  %661 = vmatpush.bf16.msra.mxu0 %v613
  %662 = vmatpush.bf16.msra.mxu0 %v607
  %663 = vmatmul.bf16.gmra.mxu0 %v634
  %v664 = vpop.f32.mrf.mxu0
  %v665 = vadd.f32 %v630, %v664
  %v666 = vpop.f32.mrf.mxu0
  %667 = vdwg.mxu0
  %668 = vmatpush.bf16.msra.mxu0 0
  %669 = vmatpush.bf16.msra.mxu0 0
  %670 = vmatpush.bf16.msra.mxu0 0
  %671 = vmatpush.bf16.msra.mxu0 0
  %672 = vmatpush.bf16.msra.mxu0 0
  %673 = vmatpush.bf16.msra.mxu0 %v641
  %674 = vmatpush.bf16.msra.mxu0 %v614
  %675 = vmatpush.bf16.msra.mxu0 %v608
  %676 = vmatmul.bf16.gmra.mxu0 %v634
  %v677 = vpop.f32.mrf.mxu0
  %v678 = vadd.f32 %v630, %v677
  %v679 = vpop.f32.mrf.mxu0
  %680 = vdwg.mxu0
  %681 = vmatpush.bf16.msra.mxu0 0
  %682 = vmatpush.bf16.msra.mxu0 0
  %683 = vmatpush.bf16.msra.mxu0 0
  %684 = vmatpush.bf16.msra.mxu0 0
  %685 = vmatpush.bf16.msra.mxu0 0
  %686 = vmatpush.bf16.msra.mxu0 %v644
  %687 = vmatpush.bf16.msra.mxu0 %v615
  %688 = vmatpush.bf16.msra.mxu0 %v609
  %689 = vmatmul.bf16.gmra.mxu0 %v634
  %v690 = vpop.f32.mrf.mxu0
  %v691 = vadd.f32 %v630, %v690
  %v692 = vpop.f32.mrf.mxu0
  %693 = vdwg.mxu0
  %694 = vmatpush.bf16.msra.mxu0 0
  %695 = vmatpush.bf16.msra.mxu0 0
  %696 = vmatpush.bf16.msra.mxu0 0
  %697 = vmatpush.bf16.msra.mxu0 0
  %698 = vmatpush.bf16.msra.mxu0 0
  %699 = vmatpush.bf16.msra.mxu0 %v647
  %700 = vmatpush.bf16.msra.mxu0 %v616
  %701 = vmatpush.bf16.msra.mxu0 %v610
  %702 = vmatmul.bf16.gmra.mxu0 %v634
  %v703 = vpop.f32.mrf.mxu0
  %v704 = vadd.f32 %v630, %v703
  %v705 = vpop.f32.mrf.mxu0
  %706 = vdwg.mxu0
  %707 = vmatpush.bf16.msra.mxu0 0
  %708 = vmatpush.bf16.msra.mxu0 0
  %709 = vmatpush.bf16.msra.mxu0 0
  %710 = vmatpush.bf16.msra.mxu0 0
  %711 = vmatpush.bf16.msra.mxu0 0
  %712 = vmatpush.bf16.msra.mxu0 %v650
  %713 = vmatpush.bf16.msra.mxu0 %v617
  %714 = vmatpush.bf16.msra.mxu0 %v611
  %715 = vmatmul.bf16.gmra.mxu0 %v634
  %v716 = vpop.f32.mrf.mxu0
  %v717 = vadd.f32 %v630, %v716
  %v718 = vpop.f32.mrf.mxu0
  %719 = vdwg.mxu0
  %720 = vmatpush.bf16.msra.mxu0 0
  %721 = vmatpush.bf16.msra.mxu0 0
  %722 = vmatpush.bf16.msra.mxu0 0
  %723 = vmatpush.bf16.msra.mxu0 0
  %724 = vmatpush.bf16.msra.mxu0 0
  %725 = vmatpush.bf16.msra.mxu0 %v653
  %726 = vmatpush.bf16.msra.mxu0 %v618
  %727 = vmatpush.bf16.msra.mxu0 %v612
  %728 = vmatmul.bf16.gmra.mxu0 %v634
  %v729 = vpop.f32.mrf.mxu0
  %v730 = vadd.f32 %v630, %v729
  %v731 = vpop.f32.mrf.mxu0
  %732 = vdwg.mxu0
  %v733 = vmax.f32 %v665, 0.0
  %v734 = vmax.f32 %v678, 0.0
  %v735 = vmax.f32 %v691, 0.0
  %v736 = vmax.f32 %v704, 0.0
  %v737 = vmax.f32 %v717, 0.0
  %v738 = vmax.f32 %v730, 0.0
  %739 = vst [vmem:[%s3] sm:$0xff] %v733
  %740 = vst [vmem:[%s3 + $0x8] sm:$0xff] %v734
  %741 = vst [vmem:[%s3 + $0x10] sm:$0xff] %v735
  %s742 = scalar_lea.vmem %s3, 24
  %743 = vst [vmem:[%s742] sm:$0xff] %v736
  %744 = vst [vmem:[%s742 + $0x8] sm:$0xff] %v737
  %745 = vst [vmem:[%s742 + $0x10] sm:$0xff] %v738
  // Predicated region
  $region14: #{conv2d_block_forward.1} parent=0 // pred_check
    _
  $region15: #{conv2d_block_forward.1} parent=0 // pred_check_branch
    %747 = sbr.rel (0) target = $region17
  $region16: #{conv2d_block_forward.1} parent=0 // pred_region
    _
  $region17: #{conv2d_block_forward.1} parent=0 // pred_fallthru
    _
  // Predicated region
  $region18: #{conv2d_block_forward.1} parent=0 // pred_check
    _
  $region19: #{conv2d_block_forward.1} parent=0 // pred_check_branch
    %749 = sbr.rel (0) target = $region21
  $region20: #{conv2d_block_forward.1} parent=0 // pred_region
    _
  $region21: #{conv2d_block_forward.1} parent=0 // pred_fallthru
    _

</llo_original>
